<compile_context>
chip_gen: v5e
topology: v5e:2x2
jax: 0.10.0
libtpu: 0.0.40
codegen_flags: <defaults>
</compile_context>

<pallas_src>
import functools

import jax
import jax.numpy as jnp
from jax.experimental import pallas as pl
from jax.experimental.pallas import tpu as pltpu


def _round_up(n, m):
    return ((n + m - 1) // m) * m


def _projection_head_kernel(x_ref, w1_ref, b1_ref, w2_ref, b2_ref,
                            gamma_ref, beta_ref, o_ref, *, logical_p):
    cdtype = w1_ref.dtype

    # In-kernel operand cast (VPU); x stays f32 in HBM.
    x = x_ref[...].astype(cdtype)          # [TB, E]
    w1 = w1_ref[...]                       # [E,  Pp]  compute dtype
    w2 = w2_ref[...]                       # [Pp, Pp]  compute dtype
    b1 = b1_ref[...]                       # [1,  Pp]  f32
    b2 = b2_ref[...]                       # [1,  Pp]  f32
    gamma = gamma_ref[...]                 # [1,  Pp]  f32
    beta = beta_ref[...]                   # [1,  Pp]  f32

    # projection = Linear(E, P); MXU with f32 accumulation.
    projected = jnp.dot(x, w1, preferred_element_type=jnp.float32) + b1   # [TB, Pp]

    # LeakyReLU (PyTorch default negative_slope = 0.01): mul + max.
    h = jnp.maximum(projected, 0.01 * projected)

    # fc = Linear(P, P), then residual add (pre-activation projected).
    y = jnp.dot(h.astype(cdtype), w2,
                preferred_element_type=jnp.float32) + b2 + projected      # [TB, Pp]

    # LayerNorm over the logical feature count.  Padded lanes of y are exact
    # zeros by construction (padded w1/w2 cols, b1/b2 lanes are zero), so the
    # sums need no masking; only the centered values do.
    p_pad = y.shape[-1]
    inv_p = 1.0 / float(logical_p)
    if logical_p == p_pad:
        mean = jnp.sum(y, axis=-1, keepdims=True) * inv_p
        yc = y - mean
    else:
        lane = jax.lax.broadcasted_iota(jnp.int32, (1, p_pad), 1)
        mask = (lane < logical_p).astype(jnp.float32)                     # [1, Pp]
        mean = jnp.sum(y, axis=-1, keepdims=True) * inv_p
        yc = (y - mean) * mask            # zero padded lanes so var is clean
    var = jnp.sum(yc * yc, axis=-1, keepdims=True) * inv_p
    inv = jax.lax.rsqrt(var + 1e-5)       # PyTorch LayerNorm eps

    # gamma/beta are zero-padded -> padded output lanes are exactly 0.
    o_ref[...] = ((yc * inv) * gamma + beta).astype(o_ref.dtype)


def prepare_projection_head_params(w1, b1, w2, b2, gamma, beta, *,
                                   compute_dtype=jnp.bfloat16):
    """One-time parameter prep: pad feature dim to a multiple of 128 and cast
    matmul operands to `compute_dtype`.  Do this at load time, not per call."""
    E, P = w1.shape
    assert w2.shape == (P, P), "fc must be square (projection_dim x projection_dim)"
    P_pad = _round_up(P, 128)
    pp = P_pad - P
    f32 = jnp.float32
    return {
        "w1": jnp.pad(w1.astype(compute_dtype), ((0, 0), (0, pp))),
        "b1": jnp.pad(b1.astype(f32).reshape(1, -1), ((0, 0), (0, pp))),
        "w2": jnp.pad(w2.astype(compute_dtype), ((0, pp), (0, pp))),
        "b2": jnp.pad(b2.astype(f32).reshape(1, -1), ((0, 0), (0, pp))),
        "gamma": jnp.pad(gamma.astype(f32).reshape(1, -1), ((0, 0), (0, pp))),
        "beta": jnp.pad(beta.astype(f32).reshape(1, -1), ((0, 0), (0, pp))),
        "logical_p": P,
    }


def projection_head(x, params, *, out_dtype=jnp.float32, block_batch=None,
                    vmem_budget_bytes=40 << 20):
    """Fused ProjectionHead forward.

    x:      [B, E] (f32 in HBM; cast to the params' compute dtype in-kernel)
    params: dict from prepare_projection_head_params (pre-padded / pre-cast).
    """
    B, E = x.shape
    w1_p, b1_p = params["w1"], params["b1"]
    w2_p, b2_p = params["w2"], params["b2"]
    gamma_p, beta_p = params["gamma"], params["beta"]
    P = params["logical_p"]
    P_pad = w1_p.shape[1]
    assert w1_p.shape[0] == E

    cd_bytes = jnp.dtype(w1_p.dtype).itemsize
    x_bytes = jnp.dtype(x.dtype).itemsize
    o_bytes = jnp.dtype(out_dtype).itemsize

    # Resident (single-buffered) weight footprint.
    resident_bytes = (E * P_pad + P_pad * P_pad) * cd_bytes + 4 * P_pad * 4

    # ---- batch tile selection -------------------------------------------
    if B <= 8:
        TB = B                              # single full-extent tile
    else:
        cap = (B // 8) * 8                  # largest multiple of 8 not above B
        if block_batch is None:
            per_row = (2 * (E * x_bytes + P_pad * o_bytes)       # 2x-buffered I/O
                       + E * cd_bytes + 5 * P_pad * 4)            # intermediates
            avail = max(vmem_budget_bytes - resident_bytes, 1 << 20)
            tb = int(min(512, avail // per_row))
        else:
            tb = int(block_batch)
        TB = max(8, min((tb // 8) * 8, cap))
    n_tiles = pl.cdiv(B, TB)                # ragged last tile handled by Pallas

    # ---- VMEM limit from actual footprint (with headroom) ----------------
    io_bytes = 2 * (TB * E * x_bytes + TB * P_pad * o_bytes)
    interm_bytes = TB * E * cd_bytes + 5 * TB * P_pad * 4
    vmem_limit = int(min(max(2 * (resident_bytes + io_bytes + interm_bytes),
                             16 << 20), 64 << 20))

    kernel = functools.partial(_projection_head_kernel, logical_p=P)

    # Batch-tiled x/out step along the grid; everything else is VMEM-resident
    # and single-buffered (constant index_map, never re-fetched).
    resident = lambda shape: pl.BlockSpec(shape, lambda i: (0,) * len(shape),
                                          pipeline_mode=pl.Buffered(1))

    out_pad = pl.pallas_call(
        kernel,
        out_shape=jax.ShapeDtypeStruct((B, P_pad), out_dtype),
        grid=(n_tiles,),
        in_specs=[
            pl.BlockSpec((TB, E), lambda i: (i, 0)),   # x (double-buffered)
            resident((E, P_pad)),                      # w1
            resident((1, P_pad)),                      # b1
            resident((P_pad, P_pad)),                  # w2
            resident((1, P_pad)),                      # b2
            resident((1, P_pad)),                      # gamma
            resident((1, P_pad)),                      # beta
        ],
        out_specs=pl.BlockSpec((TB, P_pad), lambda i: (i, 0)),
        compiler_params=pltpu.CompilerParams(
            dimension_semantics=("parallel",),         # v7x: shard batch tiles
            vmem_limit_bytes=vmem_limit),
    )(x, w1_p, b1_p, w2_p, b2_p, gamma_p, beta_p)

    # Lane-dense padded output; slice only when the consumer needs logical P.
    if P_pad != P:
        return out_pad[:, :P]
    return out_pad


def _reference(x, w1, b1, w2, b2, gamma, beta, compute_dtype=jnp.float32):
    """Plain-JAX reference, emulating the kernel's operand dtype for matmuls."""
    f32 = jnp.float32
    xc = x.astype(compute_dtype).astype(f32)
    w1c = w1.astype(compute_dtype).astype(f32)
    w2c = w2.astype(compute_dtype).astype(f32)
    proj = xc @ w1c + b1
    h = jnp.where(proj >= 0, proj, 0.01 * proj)
    y = h.astype(compute_dtype).astype(f32) @ w2c + b2 + proj
    mean = jnp.mean(y, axis=-1, keepdims=True)
    var = jnp.mean((y - mean) ** 2, axis=-1, keepdims=True)
    return (y - mean) * jax.lax.rsqrt(var + 1e-5) * gamma + beta


if __name__ == "__main__":
    key = jax.random.PRNGKey(0)
    k_x, k_w1, k_b1, k_w2, k_b2, k_xl = jax.random.split(key, 6)

    batch = 8
    embedding_dim = 32
    projection_dim = 64

    x = jax.random.normal(k_x, (batch, embedding_dim), dtype=jnp.float32)

    # Deterministic parameter init (uniform, PyTorch-Linear-style bounds).
    bound1 = 1.0 / (embedding_dim ** 0.5)
    w1 = jax.random.uniform(k_w1, (embedding_dim, projection_dim),
                            minval=-bound1, maxval=bound1, dtype=jnp.float32)
    b1 = jax.random.uniform(k_b1, (projection_dim,),
                            minval=-bound1, maxval=bound1, dtype=jnp.float32)

    bound2 = 1.0 / (projection_dim ** 0.5)
    w2 = jax.random.uniform(k_w2, (projection_dim, projection_dim),
                            minval=-bound2, maxval=bound2, dtype=jnp.float32)
    b2 = jax.random.uniform(k_b2, (projection_dim,),
                            minval=-bound2, maxval=bound2, dtype=jnp.float32)

    gamma = jnp.ones((projection_dim,), dtype=jnp.float32)
    beta = jnp.zeros((projection_dim,), dtype=jnp.float32)

    # Parameters are prepared ONCE (padded/cast) and reused for every call.
    params_f32 = prepare_projection_head_params(
        w1, b1, w2, b2, gamma, beta, compute_dtype=jnp.float32)
    params_bf16 = prepare_projection_head_params(
        w1, b1, w2, b2, gamma, beta)  # default: bf16 matmul operands

    # --- Check 1: small batch, full f32 (matches PyTorch semantics tightly). ---
    out = projection_head(x, params_f32)
    jax.block_until_ready(out)
    ref = _reference(x, w1, b1, w2, b2, gamma, beta)
    assert out.shape == (batch, projection_dim)
    assert jnp.allclose(out, ref, atol=1e-5, rtol=1e-5), "f32 mismatch (small batch)"

    # --- Check 2: non-multiple batch, adaptive tile (ragged last block), f32. ---
    big_batch = 300
    x_big = jax.random.normal(k_xl, (big_batch, embedding_dim), dtype=jnp.float32)
    out_big = projection_head(x_big, params_f32)
    jax.block_until_ready(out_big)
    ref_big = _reference(x_big, w1, b1, w2, b2, gamma, beta)
    assert out_big.shape == (big_batch, projection_dim)
    assert jnp.allclose(out_big, ref_big, atol=1e-5, rtol=1e-5), "f32 mismatch (adaptive tile)"

    # --- Check 3: forced multi-tile grid, f32. ---
    out_tiled = projection_head(x_big, params_f32, block_batch=128)
    jax.block_until_ready(out_tiled)
    assert jnp.allclose(out_tiled, ref_big, atol=1e-5, rtol=1e-5), "f32 mismatch (tiled batch)"

    # --- Check 4: bf16 matmul operands with f32 accumulation (v6e/v7x path). ---
    out_bf16 = projection_head(x_big, params_bf16, block_batch=128)
    jax.block_until_ready(out_bf16)
    ref_bf16 = _reference(x_big, w1, b1, w2, b2, gamma, beta,
                          compute_dtype=jnp.bfloat16)
    assert jnp.allclose(out_bf16, ref_bf16, atol=2e-2, rtol=2e-2), "bf16 mismatch"

    print("KERNEL_OK")
</pallas_src>

<mosaic_0001>
module attributes {stable_mosaic.version = 11 : i64} {
  func.func @_projection_head_kernel(%arg0: i32, %arg1: memref<8x32xf32, #tpu.memory_space<vmem>>, %arg2: memref<32x128xf32, #tpu.memory_space<vmem>>, %arg3: memref<1x128xf32, #tpu.memory_space<vmem>>, %arg4: memref<128x128xf32, #tpu.memory_space<vmem>>, %arg5: memref<1x128xf32, #tpu.memory_space<vmem>>, %arg6: memref<1x128xf32, #tpu.memory_space<vmem>>, %arg7: memref<1x128xf32, #tpu.memory_space<vmem>>, %arg8: memref<8x128xf32, #tpu.memory_space<vmem>>) attributes {dimension_semantics = [#tpu.dimension_semantics<parallel>], iteration_bounds = array<i64: 1>, scalar_prefetch = 0 : i64, scratch_operands = 0 : i64, tpu.core_type = #tpu.core_type<tc>, window_params = [{transform_indices = @transform_0, window_bounds = array<i64: 8, 32>}, {pipeline_mode = #tpu.pipeline_mode<synchronous>, transform_indices = @transform_1, window_bounds = array<i64: 32, 128>}, {pipeline_mode = #tpu.pipeline_mode<synchronous>, transform_indices = @transform_2, window_bounds = array<i64: 1, 128>}, {pipeline_mode = #tpu.pipeline_mode<synchronous>, transform_indices = @transform_3, window_bounds = array<i64: 128, 128>}, {pipeline_mode = #tpu.pipeline_mode<synchronous>, transform_indices = @transform_4, window_bounds = array<i64: 1, 128>}, {pipeline_mode = #tpu.pipeline_mode<synchronous>, transform_indices = @transform_5, window_bounds = array<i64: 1, 128>}, {pipeline_mode = #tpu.pipeline_mode<synchronous>, transform_indices = @transform_6, window_bounds = array<i64: 1, 128>}, {transform_indices = @transform_7, window_bounds = array<i64: 8, 128>}]} {
    %c0 = arith.constant 0 : index
    %c0_0 = arith.constant 0 : index
    %0 = vector.load %arg1[%c0, %c0_0] : memref<8x32xf32, #tpu.memory_space<vmem>>, vector<8x32xf32>
    %c0_1 = arith.constant 0 : index
    %c0_2 = arith.constant 0 : index
    %1 = vector.load %arg2[%c0_1, %c0_2] : memref<32x128xf32, #tpu.memory_space<vmem>>, vector<32x128xf32>
    %c0_3 = arith.constant 0 : index
    %c0_4 = arith.constant 0 : index
    %2 = vector.load %arg4[%c0_3, %c0_4] : memref<128x128xf32, #tpu.memory_space<vmem>>, vector<128x128xf32>
    %c0_5 = arith.constant 0 : index
    %c0_6 = arith.constant 0 : index
    %3 = vector.load %arg3[%c0_5, %c0_6] : memref<1x128xf32, #tpu.memory_space<vmem>>, vector<1x128xf32>
    %c0_7 = arith.constant 0 : index
    %c0_8 = arith.constant 0 : index
    %4 = vector.load %arg5[%c0_7, %c0_8] : memref<1x128xf32, #tpu.memory_space<vmem>>, vector<1x128xf32>
    %c0_9 = arith.constant 0 : index
    %c0_10 = arith.constant 0 : index
    %5 = vector.load %arg6[%c0_9, %c0_10] : memref<1x128xf32, #tpu.memory_space<vmem>>, vector<1x128xf32>
    %c0_11 = arith.constant 0 : index
    %c0_12 = arith.constant 0 : index
    %6 = vector.load %arg7[%c0_11, %c0_12] : memref<1x128xf32, #tpu.memory_space<vmem>>, vector<1x128xf32>
    %cst = arith.constant dense<0.000000e+00> : vector<8x128xf32>
    %7 = tpu.matmul %0, %1, %cst {dimension_numbers = #tpu.dot_dimension_numbers<[1], [0], [0], [1], [0, 0, 1, 1], [], []>} : vector<8x32xf32>, vector<32x128xf32>, vector<8x128xf32> -> vector<8x128xf32>
    %8 = vector.broadcast %3 : vector<1x128xf32> to vector<8x128xf32>
    %9 = arith.addf %7, %8 : vector<8x128xf32>
    %cst_13 = arith.constant 0.00999999977 : f32
    %10 = vector.broadcast %cst_13 : f32 to vector<8x128xf32>
    %11 = arith.mulf %10, %9 : vector<8x128xf32>
    %12 = arith.maximumf %9, %11 : vector<8x128xf32>
    %cst_14 = arith.constant dense<0.000000e+00> : vector<8x128xf32>
    %13 = tpu.matmul %12, %2, %cst_14 {dimension_numbers = #tpu.dot_dimension_numbers<[1], [0], [0], [1], [0, 0, 1, 1], [], []>} : vector<8x128xf32>, vector<128x128xf32>, vector<8x128xf32> -> vector<8x128xf32>
    %14 = vector.broadcast %4 : vector<1x128xf32> to vector<8x128xf32>
    %15 = arith.addf %13, %14 : vector<8x128xf32>
    %16 = arith.addf %15, %9 : vector<8x128xf32>
    %17 = tpu.iota {dimensions = array<i32: 1>} : vector<1x128xi32>
    %c64_i32 = arith.constant 64 : i32
    %18 = vector.broadcast %c64_i32 : i32 to vector<1x128xi32>
    %19 = arith.cmpi slt, %17, %18 : vector<1x128xi32>
    %20 = arith.extui %19 : vector<1x128xi1> to vector<1x128xi32>
    %21 = arith.sitofp %20 : vector<1x128xi32> to vector<1x128xf32>
    %cst_15 = arith.constant dense<0.000000e+00> : vector<8xf32>
    %22 = vector.multi_reduction <add>, %16, %cst_15 [1] : vector<8x128xf32> to vector<8xf32>
    %23 = vector.shape_cast %22 : vector<8xf32> to vector<8x1xf32>
    %cst_16 = arith.constant 1.562500e-02 : f32
    %24 = vector.broadcast %cst_16 : f32 to vector<8x1xf32>
    %25 = arith.mulf %23, %24 : vector<8x1xf32>
    %26 = vector.broadcast %25 : vector<8x1xf32> to vector<8x128xf32>
    %27 = arith.subf %16, %26 : vector<8x128xf32>
    %28 = vector.broadcast %21 : vector<1x128xf32> to vector<8x128xf32>
    %29 = arith.mulf %27, %28 : vector<8x128xf32>
    %30 = arith.mulf %29, %29 : vector<8x128xf32>
    %cst_17 = arith.constant dense<0.000000e+00> : vector<8xf32>
    %31 = vector.multi_reduction <add>, %30, %cst_17 [1] : vector<8x128xf32> to vector<8xf32>
    %32 = vector.shape_cast %31 : vector<8xf32> to vector<8x1xf32>
    %cst_18 = arith.constant 1.562500e-02 : f32
    %33 = vector.broadcast %cst_18 : f32 to vector<8x1xf32>
    %34 = arith.mulf %32, %33 : vector<8x1xf32>
    %cst_19 = arith.constant 9.99999974E-6 : f32
    %35 = vector.broadcast %cst_19 : f32 to vector<8x1xf32>
    %36 = arith.addf %34, %35 : vector<8x1xf32>
    %37 = math.rsqrt %36 : vector<8x1xf32>
    %38 = vector.broadcast %37 : vector<8x1xf32> to vector<8x128xf32>
    %39 = arith.mulf %29, %38 : vector<8x128xf32>
    %40 = vector.broadcast %5 : vector<1x128xf32> to vector<8x128xf32>
    %41 = arith.mulf %39, %40 : vector<8x128xf32>
    %42 = vector.broadcast %6 : vector<1x128xf32> to vector<8x128xf32>
    %43 = arith.addf %41, %42 : vector<8x128xf32>
    %c0_20 = arith.constant 0 : index
    %c0_21 = arith.constant 0 : index
    %44 = vector.load %arg8[%c0_20, %c0_21] : memref<8x128xf32, #tpu.memory_space<vmem>>, vector<8x128xf32>
    tpu.vector_store %arg8[%c0_20, %c0_21], %43 {strides = array<i32>} : memref<8x128xf32, #tpu.memory_space<vmem>>, vector<8x128xf32>,
    return
  }
  func.func @transform_0(%arg0: i32) -> (i32, i32) {
    %c0_i32 = arith.constant 0 : i32
    %c0_i32_0 = arith.constant 0 : i32
    return %arg0, %c0_i32 : i32, i32
  }
  func.func @transform_1(%arg0: i32) -> (i32, i32) {
    %c0_i32 = arith.constant 0 : i32
    %c0_i32_0 = arith.constant 0 : i32
    %c0_i32_1 = arith.constant 0 : i32
    return %c0_i32, %c0_i32_0 : i32, i32
  }
  func.func @transform_2(%arg0: i32) -> (i32, i32) {
    %c0_i32 = arith.constant 0 : i32
    %c0_i32_0 = arith.constant 0 : i32
    %c0_i32_1 = arith.constant 0 : i32
    return %c0_i32, %c0_i32_0 : i32, i32
  }
  func.func @transform_3(%arg0: i32) -> (i32, i32) {
    %c0_i32 = arith.constant 0 : i32
    %c0_i32_0 = arith.constant 0 : i32
    %c0_i32_1 = arith.constant 0 : i32
    return %c0_i32, %c0_i32_0 : i32, i32
  }
  func.func @transform_4(%arg0: i32) -> (i32, i32) {
    %c0_i32 = arith.constant 0 : i32
    %c0_i32_0 = arith.constant 0 : i32
    %c0_i32_1 = arith.constant 0 : i32
    return %c0_i32, %c0_i32_0 : i32, i32
  }
  func.func @transform_5(%arg0: i32) -> (i32, i32) {
    %c0_i32 = arith.constant 0 : i32
    %c0_i32_0 = arith.constant 0 : i32
    %c0_i32_1 = arith.constant 0 : i32
    return %c0_i32, %c0_i32_0 : i32, i32
  }
  func.func @transform_6(%arg0: i32) -> (i32, i32) {
    %c0_i32 = arith.constant 0 : i32
    %c0_i32_0 = arith.constant 0 : i32
    %c0_i32_1 = arith.constant 0 : i32
    return %c0_i32, %c0_i32_0 : i32, i32
  }
  func.func @transform_7(%arg0: i32) -> (i32, i32) {
    %c0_i32 = arith.constant 0 : i32
    %c0_i32_0 = arith.constant 0 : i32
    return %arg0, %c0_i32 : i32, i32
  }
}

</mosaic_0001>

<llo_original>
// kernel: tpu_custom_call.1
$region0: #{tpu_custom_call.1}
  #allocation0 [shape = 'u32[]', space=smem, size = 0x4, offset = 0x4, fixed_abs, tag = 'smem constant byte address 0x4 - core index']
  #allocation1 [shape = 'u32[72,128]{1,0:T(1,128)}', space=vmem, size = 0x9000, scoped, tag = 'internal scratch']
  %s0 = inlined_call_operand.hbm [shape: f32[8,32], index: 0, kind: input, shape index: {}]
  %s1 = inlined_call_operand.hbm [shape: f32[32,128], index: 1, kind: input, shape index: {}]
  %s2 = inlined_call_operand.vmem [shape: f32[1,128], index: 2, kind: input, shape index: {}]
  %s3 = inlined_call_operand.hbm [shape: f32[128,128], index: 3, kind: input, shape index: {}]
  %s4 = inlined_call_operand.vmem [shape: f32[1,128], index: 4, kind: input, shape index: {}]
  %s5 = inlined_call_operand.vmem [shape: f32[1,128], index: 5, kind: input, shape index: {}]
  %s6 = inlined_call_operand.vmem [shape: f32[1,128], index: 6, kind: input, shape index: {}]
  %s7 = inlined_call_operand.hbm [shape: f32[8,128], index: 7, kind: output, shape index: {}]
  %s8 = sld [smem:[#allocation0]]
  $region50: #{tpu_custom_call.1} parent=0
    _
  %s10 = ssub.s32 1, %s8
  %s11 = scalar_select 0, %s10, %s8
  $region1: #{tpu_custom_call.1} parent=0
    #allocation2 [shape = 'u8[4096]{0}', space=vmem, size = 0x1000, scoped, tag = 'input window, operand 0, single buffered']
    #allocation3 [shape = 's32[1]{0}', space=sflag, size = 0x4, scoped, tag = 'scoped memory for tpu_custom_call.1']
    #allocation4 [shape = 's32[1]{0}', space=sflag, size = 0x4, scoped, tag = 'scoped memory for tpu_custom_call.1']
    #allocation5 [shape = 'u8[16384]{0}', space=vmem, size = 0x4000, scoped, tag = 'input window, operand 1, single buffered']
    #allocation6 [shape = 's32[1]{0}', space=sflag, size = 0x4, scoped, tag = 'scoped memory for tpu_custom_call.1']
    #allocation7 [shape = 'u8[65536]{0}', space=vmem, size = 0x10000, scoped, tag = 'input window, operand 3, single buffered']
    #allocation8 [shape = 'u8[4096]{0}', space=vmem, size = 0x1000, scoped, tag = 'output window, operand 0, single buffered']
    %12 = vsyncpa [#allocation3], 0
    %13 = vsyncpa [#allocation6], 0
    %14 = vsyncpa [#allocation4], 0
    // Predicated region
    $region2: #{tpu_custom_call.1} parent=1 // pred_check
      _
    $region3: #{tpu_custom_call.1} parent=1 // pred_check_branch
      %16 = sbr.rel (0) target = $region5
    $region4: #{tpu_custom_call.1} parent=1 // pred_region
      %18 = vsyncadd [#allocation3], 0
      %s20 = sshll.u32 %s0, 4
      %s21 = int_to_ptr.hbm [resolvable:$true] %s20
      %s22 = sshll.u32 [#allocation2], 4
      %s23 = int_to_ptr.vmem [resolvable:$true] %s22
      %25 = dma.hbm_to_vmem [thread:$0]  %s21, 128, %s23, [#allocation3]
    $region5: #{tpu_custom_call.1} parent=1 // pred_fallthru
      _
    // Predicated region
    $region6: #{tpu_custom_call.1} parent=1 // pred_check
      _
    $region7: #{tpu_custom_call.1} parent=1 // pred_check_branch
      %27 = sbr.rel (0) target = $region9
    $region8: #{tpu_custom_call.1} parent=1 // pred_region
      %29 = vsyncadd [#allocation6], 0
      %s30 = sshll.u32 %s1, 4
      %s31 = int_to_ptr.hbm [resolvable:$true] %s30
      %s32 = sshll.u32 [#allocation5], 4
      %s33 = int_to_ptr.vmem [resolvable:$true] %s32
      %38 = dma.hbm_to_vmem [thread:$0]  %s31, 512, %s33, [#allocation6], 128, 128, 8
    $region9: #{tpu_custom_call.1} parent=1 // pred_fallthru
      _
    // Predicated region
    $region10: #{tpu_custom_call.1} parent=1 // pred_check
      _
    $region11: #{tpu_custom_call.1} parent=1 // pred_check_branch
      %40 = sbr.rel (0) target = $region13
    $region12: #{tpu_custom_call.1} parent=1 // pred_region
      _
    $region13: #{tpu_custom_call.1} parent=1 // pred_fallthru
      _
    // Predicated region
    $region14: #{tpu_custom_call.1} parent=1 // pred_check
      _
    $region15: #{tpu_custom_call.1} parent=1 // pred_check_branch
      %42 = sbr.rel (0) target = $region17
    $region16: #{tpu_custom_call.1} parent=1 // pred_region
      %44 = vsyncadd [#allocation6], 0
      %s45 = sshll.u32 %s3, 4
      %s46 = int_to_ptr.hbm [resolvable:$true] %s45
      %s47 = sshll.u32 [#allocation7], 4
      %s48 = int_to_ptr.vmem [resolvable:$true] %s47
      %53 = dma.hbm_to_vmem [thread:$0]  %s46, 2048, %s48, [#allocation6], 128, 128, 8
    $region17: #{tpu_custom_call.1} parent=1 // pred_fallthru
      _
    // Predicated region
    $region18: #{tpu_custom_call.1} parent=1 // pred_check
      _
    $region19: #{tpu_custom_call.1} parent=1 // pred_check_branch
      %55 = sbr.rel (0) target = $region21
    $region20: #{tpu_custom_call.1} parent=1 // pred_region
      _
    $region21: #{tpu_custom_call.1} parent=1 // pred_fallthru
      _
    // Predicated region
    $region22: #{tpu_custom_call.1} parent=1 // pred_check
      _
    $region23: #{tpu_custom_call.1} parent=1 // pred_check_branch
      %57 = sbr.rel (0) target = $region25
    $region24: #{tpu_custom_call.1} parent=1 // pred_region
      _
    $region25: #{tpu_custom_call.1} parent=1 // pred_fallthru
      _
    // Predicated region
    $region26: #{tpu_custom_call.1} parent=1 // pred_check
      _
    $region27: #{tpu_custom_call.1} parent=1 // pred_check_branch
      %59 = sbr.rel (0) target = $region29
    $region28: #{tpu_custom_call.1} parent=1 // pred_region
      _
    $region29: #{tpu_custom_call.1} parent=1 // pred_fallthru
      _
    // Predicated region
    $region30: #{tpu_custom_call.1} parent=1 // pred_check
      _
    $region31: #{tpu_custom_call.1} parent=1 // pred_check_branch
      %61 = sbr.rel (0) target = $region33
    $region32: #{tpu_custom_call.1} parent=1 // pred_region
      %63 = dma.done [#allocation3], 128
    $region33: #{tpu_custom_call.1} parent=1 // pred_fallthru
      _
    // Predicated region
    $region34: #{tpu_custom_call.1} parent=1 // pred_check
      _
    $region35: #{tpu_custom_call.1} parent=1 // pred_check_branch
      %65 = sbr.rel (0) target = $region37
    $region36: #{tpu_custom_call.1} parent=1 // pred_region
      %67 = dma.done [#allocation6], 512
    $region37: #{tpu_custom_call.1} parent=1 // pred_fallthru
      _
    // Predicated region
    $region38: #{tpu_custom_call.1} parent=1 // pred_check
      _
    $region39: #{tpu_custom_call.1} parent=1 // pred_check_branch
      %69 = sbr.rel (0) target = $region41
    $region40: #{tpu_custom_call.1} parent=1 // pred_region
      %71 = dma.done [#allocation6], 2048
    $region41: #{tpu_custom_call.1} parent=1 // pred_fallthru
      _
    %v72 = vld [vmem:[#allocation2] sm:$0xff]
    %v73 = vld [vmem:[#allocation5] sm:$0xff]
    %v74 = vld [vmem:[#allocation5 + $0x8] sm:$0xff]
    %v75 = vld [vmem:[#allocation5 + $0x10] sm:$0xff]
    %v76 = vld [vmem:[#allocation5 + $0x18] sm:$0xff]
    %v77 = vld [vmem:[#allocation7] sm:$0xff]
    %v78 = vld [vmem:[#allocation7 + $0x8] sm:$0xff]
    %v79 = vld [vmem:[#allocation7 + $0x10] sm:$0xff]
    %v80 = vld [vmem:[#allocation7 + $0x18] sm:$0xff]
    %v81 = vld [vmem:[#allocation7 + $0x20] sm:$0xff]
    %v82 = vld [vmem:[#allocation7 + $0x28] sm:$0xff]
    %v83 = vld [vmem:[#allocation7 + $0x30] sm:$0xff]
    %v84 = vld [vmem:[#allocation7 + $0x38] sm:$0xff]
    %v85 = vld [vmem:[#allocation7 + $0x40] sm:$0xff]
    %v86 = vld [vmem:[#allocation7 + $0x48] sm:$0xff]
    %v87 = vld [vmem:[#allocation7 + $0x50] sm:$0xff]
    %v88 = vld [vmem:[#allocation7 + $0x58] sm:$0xff]
    %v89 = vld [vmem:[#allocation7 + $0x60] sm:$0xff]
    %v90 = vld [vmem:[#allocation7 + $0x68] sm:$0xff]
    %v91 = vld [vmem:[#allocation7 + $0x70] sm:$0xff]
    %v92 = vld [vmem:[#allocation7 + $0x78] sm:$0xff]
    %v93 = vld [vmem:[%s2] sm:$0x1]
    %v94 = vld [vmem:[%s4] sm:$0x1]
    %v95 = vld [vmem:[%s5] sm:$0x1]
    %v96 = vld [vmem:[%s6] sm:$0x1]
    %v98 = vperm.slane %v93, 0
    %vm100 = vcmask 261120
    %v102 = vsel %vm100, %v72, 0
    %104 = vmatpush.msra.mxu0 0.0
    %105 = vmatpush.msra.mxu0 0.0
    %106 = vmatpush.msra.mxu0 0.0
    %107 = vmatpush.msra.mxu0 0.0
    %108 = vmatpush.msra.mxu0 0.0
    %109 = vmatpush.msra.mxu0 0.0
    %110 = vmatpush.msra.mxu0 0.0
    %111 = vmatpush.msra.mxu0 0.0
    %112 = vmatpush.msra.mxu0 0.0
    %113 = vmatpush.msra.mxu0 0.0
    %114 = vmatpush.msra.mxu0 0.0
    %115 = vmatpush.msra.mxu0 0.0
    %116 = vmatpush.msra.mxu0 %v76
    %117 = vmatpush.msra.mxu0 %v75
    %118 = vmatpush.msra.mxu0 %v74
    %119 = vmatpush.msra.mxu0 %v73
    %120 = vmatmul.f32.gmra.mxu0 %v102
    %v121 = vpop.f32.mrf.mxu0
    %v122 = vadd.f32 %v98, %v121
    %123 = vdwg.mxu0
    %v124 = vmul.f32 %v122, 0.01
    %v125 = vmax.f32 %v122, %v124
    %v127 = vperm.slane %v94, 0
    %129 = vmatpush.msra.mxu0 %v92
    %130 = vmatpush.msra.mxu0 %v91
    %131 = vmatpush.msra.mxu0 %v90
    %132 = vmatpush.msra.mxu0 %v89
    %133 = vmatpush.msra.mxu0 %v88
    %134 = vmatpush.msra.mxu0 %v87
    %135 = vmatpush.msra.mxu0 %v86
    %136 = vmatpush.msra.mxu0 %v85
    %137 = vmatpush.msra.mxu0 %v84
    %138 = vmatpush.msra.mxu0 %v83
    %139 = vmatpush.msra.mxu0 %v82
    %140 = vmatpush.msra.mxu0 %v81
    %141 = vmatpush.msra.mxu0 %v80
    %142 = vmatpush.msra.mxu0 %v79
    %143 = vmatpush.msra.mxu0 %v78
    %144 = vmatpush.msra.mxu0 %v77
    %145 = vmatmul.f32.gmra.mxu0 %v125
    %v146 = vpop.f32.mrf.mxu0
    %v147 = vadd.f32 %v127, %v146
    %148 = vdwg.mxu0
    %v149 = vadd.f32 %v147, %v122
    %v150 = vlaneseq
    %v151 = vand.u32 %v150, 127
    %vm152 = vcmp.lt.s32.totalorder %v151, 64
    %v153 = vsel %vm152, 1, 0
    %v154 = vcvt.s32.f32 %v153
    %155 = vadd.xlane.f32.xlu0 %v149
    %v156 = vpop.xlane.xlu0 %155
    %v157 = vmul.f32 %v156, 0.015625
    %v158 = vsub.f32 %v149, %v157
    %v159 = vmul.f32 %v158, %v154
    %v160 = vmul.f32 %v159, %v159
    %161 = vadd.xlane.f32.xlu0 %v160
    %v162 = vpop.xlane.xlu0 %161
    %v163 = vmul.f32 %v162, 0.015625
    %v164 = vadd.f32 %v163, 1e-05
    %v165 = vrsqrt.pop %v164
    %v166 = vmul.f32 %v165, %v164
    %v167 = vmul.f32 %v166, %v165
    %v168 = vmul.f32 0.5, %v167
    %v169 = vsub.f32 1.5, %v168
    %v170 = vmul.f32 %v165, %v169
    %vm171 = vweird.f32 %v164
    %vm172 = vweird.f32 %v165
    %vm173 = vmor %vm171, %vm172
    %v174 = vsel %vm173, %v165, %v170
    %v175 = vmul.f32 %v159, %v174
    %v177 = vperm.slane %v95, 0
    %v179 = vmul.f32 %v175, %v177
    %v181 = vperm.slane %v96, 0
    %v183 = vadd.f32 %v179, %v181
    %184 = vst [vmem:[#allocation8] sm:$0xff] %v183
    // Predicated region
    $region42: #{tpu_custom_call.1} parent=1 // pred_check
      _
    $region43: #{tpu_custom_call.1} parent=1 // pred_check_branch
      %186 = sbr.rel (0) target = $region45
    $region44: #{tpu_custom_call.1} parent=1 // pred_region
      %188 = vsyncadd [#allocation4], 0
      %s190 = sshll.u32 [#allocation8], 4
      %s191 = int_to_ptr.vmem [resolvable:$true] %s190
      %s192 = sshll.u32 %s7, 4
      %s193 = int_to_ptr.hbm [resolvable:$true] %s192
      %195 = dma.vmem_to_hbm [thread:$0]  %s191, 128, %s193, [#allocation4]
    $region45: #{tpu_custom_call.1} parent=1 // pred_fallthru
      _
    // Predicated region
    $region46: #{tpu_custom_call.1} parent=1 // pred_check
      _
    $region47: #{tpu_custom_call.1} parent=1 // pred_check_branch
      %197 = sbr.rel (0) target = $region49
    $region48: #{tpu_custom_call.1} parent=1 // pred_region
      %199 = dma.done [#allocation4], 128
    $region49: #{tpu_custom_call.1} parent=1 // pred_fallthru
      _
    %200 = vsyncpa [#allocation3], 1
    %201 = vsyncpa [#allocation6], 1
    %202 = vsyncpa [#allocation4], 1

</llo_original>
